<compile_context>
chip_gen: v7x
topology: tpu7x:2x2x1
jax: 0.10.0
libtpu: 0.0.40
codegen_flags: <defaults>
</compile_context>

<pallas_src>
import jax
import jax.numpy as jnp
from jax.experimental import pallas as pl
from jax.experimental.pallas import tpu as pltpu


# ----------------------------------------------------------------------------
# tile-size helpers
# ----------------------------------------------------------------------------
def _largest_divisor_leq(n, cap):
    d = max(1, min(n, cap))
    while n % d:
        d -= 1
    return d


def _pick_tiles(B, T, K, D, *, vmem_budget_bytes=24 << 20):
    """Row block / K tile sizes for the fused kernel.

    tb = B: the whole batch sits in one row block so the (K, D) encoder
    weight -- the dominant HBM traffic at real R3M sizes -- is streamed from
    HBM exactly once.  tk is bounded by a VMEM byte budget (double-buffered
    f32 x tile + double-buffered bf16 W_enc tile per K column) so the kernel
    never OOMs VMEM at production frame sizes, which matters most on v7x
    (64 MiB VMEM).  At the toy sizes K fits entirely, giving a (1, 1) grid.
    """
    tb = B
    tm = tb * T  # NOTE: ideally a multiple of 16 (bf16 sublane tile); B*T=8 here.
    per_col_bytes = 2 * (tm * 4 + D * 2)          # 2x for double buffering
    cap = max(1, vmem_budget_bytes // per_col_bytes)
    if K <= cap:
        tk = K                                    # single k step
    elif K % 128 == 0:
        tk = 128 * _largest_divisor_leq(K // 128, max(1, cap // 128))
    else:
        tk = _largest_divisor_leq(K, cap)
    return tb, tm, tk


# ----------------------------------------------------------------------------
# Fused kernel:
#   acc[b, :]  = sum_k  (pool @ x_k) @ W_enc[k]          (mean over T on LHS)
#   out[b, :]  = acc @ W_res_pad + b_fused               (resizer epilogue)
# ----------------------------------------------------------------------------
def _r3m_fused_kernel(pool_ref, x_ref, w_enc_ref, w_res_ref, b_ref,
                      o_ref, acc_ref):
    k = pl.program_id(1)

    @pl.when(k == 0)
    def _():
        acc_ref[...] = jnp.zeros_like(acc_ref)

    # Cast the f32 frame tile to bf16 in-kernel (no separate HBM cast pass).
    x_bf16 = x_ref[...].astype(jnp.bfloat16)                   # (tm, tk)
    # Temporal mean folded on the LHS: (tb, tm) @ (tm, tk) -> (tb, tk).
    pooled_x = jnp.dot(pool_ref[...], x_bf16,
                       preferred_element_type=jnp.float32)
    # Frame -> outdim matmul with M = tb (not tb*T): (tb, tk) @ (tk, D).
    acc_ref[...] += jnp.dot(pooled_x.astype(jnp.bfloat16), w_enc_ref[...],
                            preferred_element_type=jnp.float32)

    @pl.when(k == pl.num_programs(1) - 1)
    def _():
        # Fused resizer: (tb, D) @ (D, Lp) + b_fused.  b_fused already
        # contains b_enc @ W_res + b_res, so the encoder bias is exact here.
        out = jnp.dot(acc_ref[...].astype(jnp.bfloat16), w_res_ref[...],
                      preferred_element_type=jnp.float32)
        o_ref[...] = (out + b_ref[...]).astype(o_ref.dtype)


def r3m_fused(x_flat, w_enc_bf16, w_res_pad, b_fused_pad, *, B, T):
    """x_flat: (B*T, K) f32, w_enc: (K, D) bf16, w_res_pad: (D, Lp) bf16,
    b_fused_pad: (1, Lp) f32  ->  (B, Lp) f32 (lane-dense slab)."""
    BT, K = x_flat.shape
    D = w_enc_bf16.shape[1]
    Lp = w_res_pad.shape[1]
    assert BT == B * T

    tb, tm, tk = _pick_tiles(B, T, K, D)
    assert B % tb == 0 and K % tk == 0

    # pool[p, p*T + t] = 1/T  (mean over the T frames of batch element p).
    # bf16 pool: 1/T exact for power-of-two T; otherwise within tolerance.
    pool = (jnp.repeat(jnp.eye(tb, dtype=jnp.float32), T, axis=1)
            / float(T)).astype(jnp.bfloat16)

    grid = (B // tb, K // tk)   # (1, 1) at the shipped sizes
    return pl.pallas_call(
        _r3m_fused_kernel,
        out_shape=jax.ShapeDtypeStruct((B, Lp), jnp.float32),
        grid_spec=pltpu.PrefetchScalarGridSpec(
            num_scalar_prefetch=0,
            grid=grid,
            in_specs=[
                pl.BlockSpec((tb, tm), lambda i, k: (0, 0)),   # pool (bf16)
                pl.BlockSpec((tm, tk), lambda i, k: (i, k)),   # frames (f32)
                pl.BlockSpec((tk, D), lambda i, k: (k, 0)),    # W_enc (bf16)
                pl.BlockSpec((D, Lp), lambda i, k: (0, 0)),    # W_res_pad (bf16)
                pl.BlockSpec((1, Lp), lambda i, k: (0, 0)),    # b_fused (f32)
            ],
            out_specs=pl.BlockSpec((tb, Lp), lambda i, k: (i, 0)),
            scratch_shapes=[pltpu.VMEM((tb, D), jnp.float32)],
        ),
        compiler_params=pltpu.CompilerParams(
            dimension_semantics=("parallel", "arbitrary")),
    )(pool, x_flat, w_enc_bf16, w_res_pad, b_fused_pad)


# ----------------------------------------------------------------------------
# Parameters
# ----------------------------------------------------------------------------
def init_params(key, *, frame_dim, outdim, latent_dim):
    k1, k2, k3, k4 = jax.random.split(key, 4)
    return {
        # synthetic encoder stand-in (see TODO(synk) above)
        "w_enc": jax.random.normal(k1, (frame_dim, outdim), jnp.float32)
                 / jnp.sqrt(jnp.float32(frame_dim)),
        "b_enc": 0.01 * jax.random.normal(k2, (1, outdim), jnp.float32),
        # self.resizer = nn.Linear(outdim, latent_dim)
        "w_res": jax.random.normal(k3, (outdim, latent_dim), jnp.float32)
                 / jnp.sqrt(jnp.float32(outdim)),
        "b_res": 0.01 * jax.random.normal(k4, (1, latent_dim), jnp.float32),
    }


def prepare_params(params):
    """One-time kernel-ready parameter prep (casts, padding, bias fusion)."""
    D, L = params["w_res"].shape
    Lp = 128 * pl.cdiv(L, 128)                     # lane-dense output width
    w_res_pad = jnp.zeros((D, Lp), jnp.float32).at[:, :L].set(params["w_res"])
    # (feats + b_enc) @ W_res + b_res == feats @ W_res + (b_enc @ W_res + b_res)
    b_fused = params["b_enc"] @ params["w_res"] + params["b_res"]   # (1, L)
    b_fused_pad = jnp.zeros((1, Lp), jnp.float32).at[:, :L].set(b_fused)
    return {
        "w_enc": params["w_enc"].astype(jnp.bfloat16),   # cast once, not per call
        "w_res_pad": w_res_pad.astype(jnp.bfloat16),
        "b_fused_pad": b_fused_pad,
    }


# ----------------------------------------------------------------------------
# Wrapper reproducing R3MMultiFrame.forward
# ----------------------------------------------------------------------------
def r3m_multiframe_forward(x, kparams, *, latent_dim):
    B, TC, H, W = x.shape
    C = 3
    T = TC // C
    K = C * H * W
    # (B, T*C, H, W) -> (B*T, C*H*W); same row-major semantics as torch.reshape.
    x_flat = x.reshape(B * T, K)                   # f32; bf16 cast is in-kernel
    out_pad = r3m_fused(x_flat, kparams["w_enc"], kparams["w_res_pad"],
                        kparams["b_fused_pad"], B=B, T=T)       # (B, Lp)
    return out_pad[:, :latent_dim]                 # (B, latent_dim)


if __name__ == "__main__":
    key = jax.random.PRNGKey(0)
    kx, kp = jax.random.split(key)

    B, T, C, H, W = 2, 4, 3, 16, 16
    outdim, latent_dim = 256, 32
    frame_dim = C * H * W

    x = jax.random.normal(kx, (B, T * C, H, W), jnp.float32)
    params = init_params(kp, frame_dim=frame_dim, outdim=outdim,
                         latent_dim=latent_dim)
    kparams = prepare_params(params)

    out = jax.block_until_ready(
        r3m_multiframe_forward(x, kparams, latent_dim=latent_dim))

    # pure-f32 reference of the module forward (synthetic encoder stand-in)
    x_flat = x.reshape(B * T, frame_dim)
    feats = x_flat @ params["w_enc"] + params["b_enc"]
    ref = (feats.reshape(B, T, -1).mean(axis=1) @ params["w_res"]
           + params["b_res"])

    assert out.shape == (B, latent_dim)
    assert jnp.allclose(out, ref, atol=3e-2, rtol=3e-2), "mismatch vs reference"

    print("KERNEL_OK")
</pallas_src>

<mosaic_0001>
module attributes {stable_mosaic.version = 11 : i64} {
  func.func @_r3m_fused_kernel(%arg0: i32, %arg1: i32, %arg2: memref<2x8xbf16, #tpu.memory_space<vmem>>, %arg3: memref<8x768xf32, #tpu.memory_space<vmem>>, %arg4: memref<768x256xbf16, #tpu.memory_space<vmem>>, %arg5: memref<256x128xbf16, #tpu.memory_space<vmem>>, %arg6: memref<1x128xf32, #tpu.memory_space<vmem>>, %arg7: memref<2x128xf32, #tpu.memory_space<vmem>>, %arg8: memref<2x256xf32, #tpu.memory_space<vmem>>) attributes {dimension_semantics = [#tpu.dimension_semantics<parallel>, #tpu.dimension_semantics<arbitrary>], iteration_bounds = array<i64: 1, 1>, scalar_prefetch = 0 : i64, scratch_operands = 1 : i64, tpu.core_type = #tpu.core_type<tc>, window_params = [{pipeline_mode = #tpu.pipeline_mode<synchronous>, transform_indices = @transform_0, window_bounds = array<i64: 2, 8>}, {transform_indices = @transform_1, window_bounds = array<i64: 8, 768>}, {transform_indices = @transform_2, window_bounds = array<i64: 768, 256>}, {pipeline_mode = #tpu.pipeline_mode<synchronous>, transform_indices = @transform_3, window_bounds = array<i64: 256, 128>}, {pipeline_mode = #tpu.pipeline_mode<synchronous>, transform_indices = @transform_4, window_bounds = array<i64: 1, 128>}, {transform_indices = @transform_5, window_bounds = array<i64: 2, 128>}]} {
    %c0_i32 = arith.constant 0 : i32
    %0 = arith.cmpi eq, %arg1, %c0_i32 : i32
    %1 = arith.extui %0 : i1 to i32
    %c0_i32_0 = arith.constant 0 : i32
    %2 = arith.cmpi ne, %1, %c0_i32_0 : i32
    scf.if %2 {
      %cst_13 = arith.constant 0.000000e+00 : f32
      %16 = vector.broadcast %cst_13 : f32 to vector<2x256xf32>
      %c0_14 = arith.constant 0 : index
      %c0_15 = arith.constant 0 : index
      %17 = vector.load %arg8[%c0_14, %c0_15] : memref<2x256xf32, #tpu.memory_space<vmem>>, vector<2x256xf32>
      tpu.vector_store %arg8[%c0_14, %c0_15], %16 {strides = array<i32>} : memref<2x256xf32, #tpu.memory_space<vmem>>, vector<2x256xf32>,
    } else {
    }
    %c0 = arith.constant 0 : index
    %c0_1 = arith.constant 0 : index
    %3 = vector.load %arg3[%c0, %c0_1] : memref<8x768xf32, #tpu.memory_space<vmem>>, vector<8x768xf32>
    %4 = arith.truncf %3 : vector<8x768xf32> to vector<8x768xbf16>
    %c0_2 = arith.constant 0 : index
    %c0_3 = arith.constant 0 : index
    %5 = vector.load %arg2[%c0_2, %c0_3] : memref<2x8xbf16, #tpu.memory_space<vmem>>, vector<2x8xbf16>
    %cst = arith.constant dense<0.000000e+00> : vector<2x768xf32>
    %6 = tpu.matmul %5, %4, %cst {dimension_numbers = #tpu.dot_dimension_numbers<[1], [0], [0], [1], [0, 0, 1, 1], [], []>} : vector<2x8xbf16>, vector<8x768xbf16>, vector<2x768xf32> -> vector<2x768xf32>
    %c0_4 = arith.constant 0 : index
    %c0_5 = arith.constant 0 : index
    %7 = vector.load %arg8[%c0_4, %c0_5] : memref<2x256xf32, #tpu.memory_space<vmem>>, vector<2x256xf32>
    %8 = arith.truncf %6 : vector<2x768xf32> to vector<2x768xbf16>
    %c0_6 = arith.constant 0 : index
    %c0_7 = arith.constant 0 : index
    %9 = vector.load %arg4[%c0_6, %c0_7] : memref<768x256xbf16, #tpu.memory_space<vmem>>, vector<768x256xbf16>
    %cst_8 = arith.constant dense<0.000000e+00> : vector<2x256xf32>
    %10 = tpu.matmul %8, %9, %cst_8 {dimension_numbers = #tpu.dot_dimension_numbers<[1], [0], [0], [1], [0, 0, 1, 1], [], []>} : vector<2x768xbf16>, vector<768x256xbf16>, vector<2x256xf32> -> vector<2x256xf32>
    %11 = arith.addf %7, %10 : vector<2x256xf32>
    %c0_9 = arith.constant 0 : index
    %c0_10 = arith.constant 0 : index
    %12 = vector.load %arg8[%c0_9, %c0_10] : memref<2x256xf32, #tpu.memory_space<vmem>>, vector<2x256xf32>
    tpu.vector_store %arg8[%c0_9, %c0_10], %11 {strides = array<i32>} : memref<2x256xf32, #tpu.memory_space<vmem>>, vector<2x256xf32>,
    %c0_i32_11 = arith.constant 0 : i32
    %13 = arith.cmpi eq, %arg1, %c0_i32_11 : i32
    %14 = arith.extui %13 : i1 to i32
    %c0_i32_12 = arith.constant 0 : i32
    %15 = arith.cmpi ne, %14, %c0_i32_12 : i32
    scf.if %15 {
      %c0_13 = arith.constant 0 : index
      %c0_14 = arith.constant 0 : index
      %16 = vector.load %arg8[%c0_13, %c0_14] : memref<2x256xf32, #tpu.memory_space<vmem>>, vector<2x256xf32>
      %17 = arith.truncf %16 : vector<2x256xf32> to vector<2x256xbf16>
      %c0_15 = arith.constant 0 : index
      %c0_16 = arith.constant 0 : index
      %18 = vector.load %arg5[%c0_15, %c0_16] : memref<256x128xbf16, #tpu.memory_space<vmem>>, vector<256x128xbf16>
      %cst_17 = arith.constant dense<0.000000e+00> : vector<2x128xf32>
      %19 = tpu.matmul %17, %18, %cst_17 {dimension_numbers = #tpu.dot_dimension_numbers<[1], [0], [0], [1], [0, 0, 1, 1], [], []>} : vector<2x256xbf16>, vector<256x128xbf16>, vector<2x128xf32> -> vector<2x128xf32>
      %c0_18 = arith.constant 0 : index
      %c0_19 = arith.constant 0 : index
      %20 = vector.load %arg6[%c0_18, %c0_19] : memref<1x128xf32, #tpu.memory_space<vmem>>, vector<1x128xf32>
      %21 = vector.broadcast %20 : vector<1x128xf32> to vector<2x128xf32>
      %22 = arith.addf %19, %21 : vector<2x128xf32>
      %c0_20 = arith.constant 0 : index
      %c0_21 = arith.constant 0 : index
      %23 = vector.load %arg7[%c0_20, %c0_21] : memref<2x128xf32, #tpu.memory_space<vmem>>, vector<2x128xf32>
      tpu.vector_store %arg7[%c0_20, %c0_21], %22 {strides = array<i32>} : memref<2x128xf32, #tpu.memory_space<vmem>>, vector<2x128xf32>,
    } else {
    }
    return
  }
  func.func @transform_0(%arg0: i32, %arg1: i32) -> (i32, i32) {
    %c0_i32 = arith.constant 0 : i32
    %c0_i32_0 = arith.constant 0 : i32
    %c0_i32_1 = arith.constant 0 : i32
    return %c0_i32, %c0_i32_0 : i32, i32
  }
  func.func @transform_1(%arg0: i32, %arg1: i32) -> (i32, i32) {
    %c0_i32 = arith.constant 0 : i32
    return %arg0, %arg1 : i32, i32
  }
  func.func @transform_2(%arg0: i32, %arg1: i32) -> (i32, i32) {
    %c0_i32 = arith.constant 0 : i32
    %c0_i32_0 = arith.constant 0 : i32
    return %arg1, %c0_i32 : i32, i32
  }
  func.func @transform_3(%arg0: i32, %arg1: i32) -> (i32, i32) {
    %c0_i32 = arith.constant 0 : i32
    %c0_i32_0 = arith.constant 0 : i32
    %c0_i32_1 = arith.constant 0 : i32
    return %c0_i32, %c0_i32_0 : i32, i32
  }
  func.func @transform_4(%arg0: i32, %arg1: i32) -> (i32, i32) {
    %c0_i32 = arith.constant 0 : i32
    %c0_i32_0 = arith.constant 0 : i32
    %c0_i32_1 = arith.constant 0 : i32
    return %c0_i32, %c0_i32_0 : i32, i32
  }
  func.func @transform_5(%arg0: i32, %arg1: i32) -> (i32, i32) {
    %c0_i32 = arith.constant 0 : i32
    %c0_i32_0 = arith.constant 0 : i32
    return %arg0, %c0_i32 : i32, i32
  }
}

</mosaic_0001>

<llo_original>
// kernel: tpu_custom_call.1
$region0: #{tpu_custom_call.1}
  #allocation0 [shape = 'u32[]', space=smem, size = 0x4, offset = 0x4, fixed_abs, tag = 'smem constant byte address 0x4 - core index']
  #allocation1 [shape = 'u32[144,128]{1,0:T(1,128)}', space=vmem, size = 0x12000, scoped, tag = 'internal scratch']
  #allocation2 [shape = 'f32[2,256]{1,0:T(2,128)}', space=vmem, size = 0x800, scoped, tag = 'scratch operand']
  %s0 = inlined_call_operand.hbm [shape: bf16[2,8], index: 0, kind: input, shape index: {}]
  %s1 = inlined_call_operand.hbm [shape: f32[8,768], index: 1, kind: input, shape index: {}]
  %s2 = inlined_call_operand.hbm [shape: bf16[768,256], index: 2, kind: input, shape index: {}]
  %s3 = inlined_call_operand.hbm [shape: bf16[256,128], index: 3, kind: input, shape index: {}]
  %s4 = inlined_call_operand.vmem [shape: f32[1,128], index: 4, kind: input, shape index: {}]
  %s5 = inlined_call_operand.hbm [shape: f32[2,128], index: 5, kind: output, shape index: {}]
  %s6 = sld [smem:[#allocation0]]
  $region54: #{tpu_custom_call.1} parent=0
    _
  %s8 = ssub.s32 1, %s6
  %s9 = scalar_select 0, %s8, %s6
  $region1: #{tpu_custom_call.1} parent=0
    #allocation3 [shape = 'u8[512]{0}', space=vmem, size = 0x400, scoped, tag = 'input window, operand 0, single buffered']
    #allocation4 [shape = 's32[1]{0}', space=sflag, size = 0x4, scoped, tag = 'scoped memory for tpu_custom_call.1']
    #allocation5 [shape = 's32[1]{0}', space=sflag, size = 0x4, scoped, tag = 'scoped memory for tpu_custom_call.1']
    #allocation6 [shape = 'u8[24576]{0}', space=vmem, size = 0x6000, scoped, tag = 'input window, operand 1, single buffered']
    #allocation7 [shape = 's32[1]{0}', space=sflag, size = 0x4, scoped, tag = 'scoped memory for tpu_custom_call.1']
    #allocation8 [shape = 'u8[393216]{0}', space=vmem, size = 0x60000, scoped, tag = 'input window, operand 2, single buffered']
    #allocation9 [shape = 'u8[65536]{0}', space=vmem, size = 0x10000, scoped, tag = 'input window, operand 3, single buffered']
    #allocation10 [shape = 's32[1]{0}', space=sflag, size = 0x4, scoped, tag = 'scoped memory for tpu_custom_call.1']
    #allocation11 [shape = 'u8[1024]{0}', space=vmem, size = 0x400, scoped, tag = 'output window, operand 0, single buffered']
    %10 = vsyncpa [#allocation4], 0
    %11 = vsyncpa [#allocation7], 0
    %12 = vsyncpa [#allocation10], 0
    %13 = vsyncpa [#allocation5], 0
    // Predicated region
    $region2: #{tpu_custom_call.1} parent=1 // pred_check
      _
    $region3: #{tpu_custom_call.1} parent=1 // pred_check_branch
      %15 = sbr.rel (0) target = $region5
    $region4: #{tpu_custom_call.1} parent=1 // pred_region
      %s17 = ssub.s32 16, 16
      %18 = vsyncadd [#allocation4], %s17
      %s20 = sshll.u32 [#allocation3], 4
      %s21 = int_to_ptr.vmem [resolvable:$true] %s20
      %23 = dma.hbm_to_vmem [thread:$0]  %s0, 16, %s21, [#allocation4]
    $region5: #{tpu_custom_call.1} parent=1 // pred_fallthru
      _
    // Predicated region
    $region6: #{tpu_custom_call.1} parent=1 // pred_check
      _
    $region7: #{tpu_custom_call.1} parent=1 // pred_check_branch
      %25 = sbr.rel (0) target = $region9
    $region8: #{tpu_custom_call.1} parent=1 // pred_region
      %s27 = ssub.s32 768, 768
      %28 = vsyncadd [#allocation7], %s27
      %s30 = sshll.u32 [#allocation6], 4
      %s31 = int_to_ptr.vmem [resolvable:$true] %s30
      %33 = dma.hbm_to_vmem [thread:$0]  %s1, 768, %s31, [#allocation7]
    $region9: #{tpu_custom_call.1} parent=1 // pred_fallthru
      _
    // Predicated region
    $region10: #{tpu_custom_call.1} parent=1 // pred_check
      _
    $region11: #{tpu_custom_call.1} parent=1 // pred_check_branch
      %35 = sbr.rel (0) target = $region13
    $region12: #{tpu_custom_call.1} parent=1 // pred_region
      %s37 = ssub.s32 12288, 12288
      %38 = vsyncadd [#allocation7], %s37
      %s39 = sshll.u32 [#allocation8], 4
      %s40 = int_to_ptr.vmem [resolvable:$true] %s39
      %45 = dma.hbm_to_vmem [thread:$0]  %s2, 12288, %s40, [#allocation7], 128, 128, 8
    $region13: #{tpu_custom_call.1} parent=1 // pred_fallthru
      _
    // Predicated region
    $region14: #{tpu_custom_call.1} parent=1 // pred_check
      _
    $region15: #{tpu_custom_call.1} parent=1 // pred_check_branch
      %47 = sbr.rel (0) target = $region17
    $region16: #{tpu_custom_call.1} parent=1 // pred_region
      %s49 = ssub.s32 2048, 2048
      %50 = vsyncadd [#allocation10], %s49
      %s51 = sshll.u32 [#allocation9], 4
      %s52 = int_to_ptr.vmem [resolvable:$true] %s51
      %57 = dma.hbm_to_vmem [thread:$0]  %s3, 2048, %s52, [#allocation10], 64, 64, 4
    $region17: #{tpu_custom_call.1} parent=1 // pred_fallthru
      _
    // Predicated region
    $region18: #{tpu_custom_call.1} parent=1 // pred_check
      _
    $region19: #{tpu_custom_call.1} parent=1 // pred_check_branch
      %59 = sbr.rel (0) target = $region21
    $region20: #{tpu_custom_call.1} parent=1 // pred_region
      _
    $region21: #{tpu_custom_call.1} parent=1 // pred_fallthru
      _
    // Predicated region
    $region22: #{tpu_custom_call.1} parent=1 // pred_check
      _
    $region23: #{tpu_custom_call.1} parent=1 // pred_check_branch
      %61 = sbr.rel (0) target = $region25
    $region24: #{tpu_custom_call.1} parent=1 // pred_region
      %62 = dma.done [#allocation4], 16
    $region25: #{tpu_custom_call.1} parent=1 // pred_fallthru
      _
    // Predicated region
    $region26: #{tpu_custom_call.1} parent=1 // pred_check
      _
    $region27: #{tpu_custom_call.1} parent=1 // pred_check_branch
      %64 = sbr.rel (0) target = $region29
    $region28: #{tpu_custom_call.1} parent=1 // pred_region
      %65 = dma.done [#allocation7], 768
    $region29: #{tpu_custom_call.1} parent=1 // pred_fallthru
      _
    // Predicated region
    $region30: #{tpu_custom_call.1} parent=1 // pred_check
      _
    $region31: #{tpu_custom_call.1} parent=1 // pred_check_branch
      %67 = sbr.rel (0) target = $region33
    $region32: #{tpu_custom_call.1} parent=1 // pred_region
      %68 = dma.done [#allocation7], 12288
    $region33: #{tpu_custom_call.1} parent=1 // pred_fallthru
      _
    // Predicated region
    $region34: #{tpu_custom_call.1} parent=1 // pred_check
      _
    $region35: #{tpu_custom_call.1} parent=1 // pred_check_branch
      %70 = sbr.rel (0) target = $region37
    $region36: #{tpu_custom_call.1} parent=1 // pred_region
      %71 = dma.done [#allocation10], 2048
    $region37: #{tpu_custom_call.1} parent=1 // pred_fallthru
      _
    %p73 = scmp.eq.s32.totalorder 0, 0
    // Predicated region
    $region38: #{tpu_custom_call.1} parent=1 // pred_check
      %p74 = pneg %p73
    $region39: #{tpu_custom_call.1} parent=1 // pred_check_branch
      %76 = sbr.rel (%p74) target = $region41
    $region40: #{tpu_custom_call.1} parent=1 // pred_region
      %77 = vst [vmem:[#allocation2] sm:$0xf] 0.0
    $region41: #{tpu_custom_call.1} parent=1 // pred_fallthru
      _
    %v78 = vld [vmem:[#allocation6] sm:$0xff]
    %v79 = vld [vmem:[#allocation6 + $0x8] sm:$0xff]
    %v80 = vld [vmem:[#allocation6 + $0x10] sm:$0xff]
    %v81 = vld [vmem:[#allocation6 + $0x18] sm:$0xff]
    %v82 = vld [vmem:[#allocation6 + $0x20] sm:$0xff]
    %v83 = vld [vmem:[#allocation6 + $0x28] sm:$0xff]
    %v84 = vpack.c.bf16 %v78, %v78
    %v85 = vpack.c.bf16 %v79, %v79
    %v86 = vpack.c.bf16 %v80, %v80
    %v87 = vpack.c.bf16 %v81, %v81
    %v88 = vpack.c.bf16 %v82, %v82
    %v89 = vpack.c.bf16 %v83, %v83
    %v90 = vld [vmem:[#allocation3] sm:$0x1]
    %vm91 = vcmask 64512
    %v93 = vsel %vm91, %v90, 0
    %vm95 = vcmask 1043456
    %v97 = vsel %vm95, %v84, 0
    %v100 = vsel %vm95, %v85, 0
    %v103 = vsel %vm95, %v86, 0
    %v106 = vsel %vm95, %v87, 0
    %v109 = vsel %vm95, %v88, 0
    %v112 = vsel %vm95, %v89, 0
    %114 = vmatprep.subr.bf16.mxu0 %v100
    %115 = vmatpush1.bf16.msra.mxu0 %v97
    %116 = vmatprep.subr.bf16.mxu0 0
    %117 = vmatpush1.bf16.msra.mxu0 0
    %118 = vmatprep.subr.bf16.mxu0 0
    %119 = vmatpush1.bf16.msra.mxu0 0
    %120 = vmatprep.subr.bf16.mxu0 0
    %121 = vmatpush1.bf16.msra.mxu0 0
    %122 = vmatprep.subr.bf16.mxu0 0
    %123 = vmatpush1.bf16.msra.mxu0 0
    %124 = vmatprep.subr.bf16.mxu0 0
    %125 = vmatpush1.bf16.msra.mxu0 0
    %126 = vmatprep.subr.bf16.mxu0 0
    %127 = vmatpush1.bf16.msra.mxu0 0
    %128 = vmatprep.subr.bf16.mxu0 0
    %129 = vmatpush1.bf16.msra.mxu0 0
    %130 = vmatprep.subr.bf16.mxu0 0
    %131 = vmatpush1.bf16.msra.mxu0 0
    %132 = vmatprep.subr.bf16.mxu0 0
    %133 = vmatpush1.bf16.msra.mxu0 0
    %134 = vmatprep.subr.bf16.mxu0 0
    %135 = vmatpush1.bf16.msra.mxu0 0
    %136 = vmatprep.subr.bf16.mxu0 0
    %137 = vmatpush1.bf16.msra.mxu0 0
    %138 = vmatprep.subr.bf16.mxu0 0
    %139 = vmatpush1.bf16.msra.mxu0 0
    %140 = vmatprep.subr.bf16.mxu0 0
    %141 = vmatpush1.bf16.msra.mxu0 0
    %142 = vmatprep.subr.bf16.mxu0 0
    %143 = vmatpush1.bf16.msra.mxu0 0
    %144 = vmatprep.subr.bf16.mxu0 0
    %145 = vmatpush1.bf16.msra.mxu0 0
    %146 = vmatprep.mubr.bf16.mxu0 0
    %147 = vmatmul.mubr.bf16.gmra.mrb[0].mxu0 %v93
    %v148 = vpop.f32.mrb[0].mxu0
    %v149 = vadd.f32 0.0, %v148
    %v150 = vpop.f32.mrb[0].mxu0
    %v151 = vadd.f32 0.0, %v150
    %v152 = vpop.f32.mrb[0].mxu0
    %v153 = vpop.f32.mrb[0].mxu0
    %154 = vdwg.mxu0
    %155 = vmatprep.subr.bf16.mxu0 %v106
    %156 = vmatpush1.bf16.msra.mxu0 %v103
    %157 = vmatprep.subr.bf16.mxu0 0
    %158 = vmatpush1.bf16.msra.mxu0 0
    %159 = vmatprep.subr.bf16.mxu0 0
    %160 = vmatpush1.bf16.msra.mxu0 0
    %161 = vmatprep.subr.bf16.mxu0 0
    %162 = vmatpush1.bf16.msra.mxu0 0
    %163 = vmatprep.subr.bf16.mxu0 0
    %164 = vmatpush1.bf16.msra.mxu0 0
    %165 = vmatprep.subr.bf16.mxu0 0
    %166 = vmatpush1.bf16.msra.mxu0 0
    %167 = vmatprep.subr.bf16.mxu0 0
    %168 = vmatpush1.bf16.msra.mxu0 0
    %169 = vmatprep.subr.bf16.mxu0 0
    %170 = vmatpush1.bf16.msra.mxu0 0
    %171 = vmatprep.subr.bf16.mxu0 0
    %172 = vmatpush1.bf16.msra.mxu0 0
    %173 = vmatprep.subr.bf16.mxu0 0
    %174 = vmatpush1.bf16.msra.mxu0 0
    %175 = vmatprep.subr.bf16.mxu0 0
    %176 = vmatpush1.bf16.msra.mxu0 0
    %177 = vmatprep.subr.bf16.mxu0 0
    %178 = vmatpush1.bf16.msra.mxu0 0
    %179 = vmatprep.subr.bf16.mxu0 0
    %180 = vmatpush1.bf16.msra.mxu0 0
    %181 = vmatprep.subr.bf16.mxu0 0
    %182 = vmatpush1.bf16.msra.mxu0 0
    %183 = vmatprep.subr.bf16.mxu0 0
    %184 = vmatpush1.bf16.msra.mxu0 0
    %185 = vmatprep.subr.bf16.mxu0 0
    %186 = vmatpush1.bf16.msra.mxu0 0
    %187 = vmatprep.mubr.bf16.mxu0 0
    %188 = vmatmul.mubr.bf16.gmra.mrb[0].mxu0 %v93
    %v189 = vpop.f32.mrb[0].mxu0
    %v190 = vadd.f32 0.0, %v189
    %v191 = vpop.f32.mrb[0].mxu0
    %v192 = vadd.f32 0.0, %v191
    %v193 = vpop.f32.mrb[0].mxu0
    %v194 = vpop.f32.mrb[0].mxu0
    %195 = vdwg.mxu0
    %196 = vmatprep.subr.bf16.mxu0 %v112
    %197 = vmatpush1.bf16.msra.mxu0 %v109
    %198 = vmatprep.subr.bf16.mxu0 0
    %199 = vmatpush1.bf16.msra.mxu0 0
    %200 = vmatprep.subr.bf16.mxu0 0
    %201 = vmatpush1.bf16.msra.mxu0 0
    %202 = vmatprep.subr.bf16.mxu0 0
    %203 = vmatpush1.bf16.msra.mxu0 0
    %204 = vmatprep.subr.bf16.mxu0 0
    %205 = vmatpush1.bf16.msra.mxu0 0
    %206 = vmatprep.subr.bf16.mxu0 0
    %207 = vmatpush1.bf16.msra.mxu0 0
    %208 = vmatprep.subr.bf16.mxu0 0
    %209 = vmatpush1.bf16.msra.mxu0 0
    %210 = vmatprep.subr.bf16.mxu0 0
    %211 = vmatpush1.bf16.msra.mxu0 0
    %212 = vmatprep.subr.bf16.mxu0 0
    %213 = vmatpush1.bf16.msra.mxu0 0
    %214 = vmatprep.subr.bf16.mxu0 0
    %215 = vmatpush1.bf16.msra.mxu0 0
    %216 = vmatprep.subr.bf16.mxu0 0
    %217 = vmatpush1.bf16.msra.mxu0 0
    %218 = vmatprep.subr.bf16.mxu0 0
    %219 = vmatpush1.bf16.msra.mxu0 0
    %220 = vmatprep.subr.bf16.mxu0 0
    %221 = vmatpush1.bf16.msra.mxu0 0
    %222 = vmatprep.subr.bf16.mxu0 0
    %223 = vmatpush1.bf16.msra.mxu0 0
    %224 = vmatprep.subr.bf16.mxu0 0
    %225 = vmatpush1.bf16.msra.mxu0 0
    %226 = vmatprep.subr.bf16.mxu0 0
    %227 = vmatpush1.bf16.msra.mxu0 0
    %228 = vmatprep.mubr.bf16.mxu0 0
    %229 = vmatmul.mubr.bf16.gmra.mrb[0].mxu0 %v93
    %v230 = vpop.f32.mrb[0].mxu0
    %v231 = vadd.f32 0.0, %v230
    %v232 = vpop.f32.mrb[0].mxu0
    %v233 = vadd.f32 0.0, %v232
    %v234 = vpop.f32.mrb[0].mxu0
    %v235 = vpop.f32.mrb[0].mxu0
    %236 = vdwg.mxu0
    %v237 = vld [vmem:[#allocation2] sm:$0xf]
    %v238 = vpack.c.bf16 %v149, %v149
    %v239 = vpack.c.bf16 %v151, %v151
    %v240 = vpack.c.bf16 %v190, %v190
    %v241 = vpack.c.bf16 %v192, %v192
    %v242 = vpack.c.bf16 %v231, %v231
    %v243 = vpack.c.bf16 %v233, %v233
    %v244 = vld [vmem:[#allocation8] sm:$0xff]
    %v245 = vld [vmem:[#allocation8 + $0x8] sm:$0xff]
    %v246 = vld [vmem:[#allocation8 + $0x10] sm:$0xff]
    %v247 = vld [vmem:[#allocation8 + $0x18] sm:$0xff]
    %v248 = vld [vmem:[#allocation8 + $0x20] sm:$0xff]
    %v249 = vld [vmem:[#allocation8 + $0x28] sm:$0xff]
    %v250 = vld [vmem:[#allocation8 + $0x30] sm:$0xff]
    %v251 = vld [vmem:[#allocation8 + $0x38] sm:$0xff]
    %v252 = vld [vmem:[#allocation8 + $0x40] sm:$0xff]
    %v253 = vld [vmem:[#allocation8 + $0x48] sm:$0xff]
    %v254 = vld [vmem:[#allocation8 + $0x50] sm:$0xff]
    %v255 = vld [vmem:[#allocation8 + $0x58] sm:$0xff]
    %v256 = vld [vmem:[#allocation8 + $0x60] sm:$0xff]
    %v257 = vld [vmem:[#allocation8 + $0x68] sm:$0xff]
    %v258 = vld [vmem:[#allocation8 + $0x70] sm:$0xff]
    %v259 = vld [vmem:[#allocation8 + $0x78] sm:$0xff]
    %v260 = vld [vmem:[#allocation8 + $0x80] sm:$0xff]
    %v261 = vld [vmem:[#allocation8 + $0x88] sm:$0xff]
    %v262 = vld [vmem:[#allocation8 + $0x90] sm:$0xff]
    %v263 = vld [vmem:[#allocation8 + $0x98] sm:$0xff]
    %v264 = vld [vmem:[#allocation8 + $0xa0] sm:$0xff]
    %v265 = vld [vmem:[#allocation8 + $0xa8] sm:$0xff]
    %v266 = vld [vmem:[#allocation8 + $0xb0] sm:$0xff]
    %v267 = vld [vmem:[#allocation8 + $0xb8] sm:$0xff]
    %v268 = vld [vmem:[#allocation8 + $0xc0] sm:$0xff]
    %v269 = vld [vmem:[#allocation8 + $0xc8] sm:$0xff]
    %v270 = vld [vmem:[#allocation8 + $0xd0] sm:$0xff]
    %v271 = vld [vmem:[#allocation8 + $0xd8] sm:$0xff]
    %v272 = vld [vmem:[#allocation8 + $0xe0] sm:$0xff]
    %v273 = vld [vmem:[#allocation8 + $0xe8] sm:$0xff]
    %v274 = vld [vmem:[#allocation8 + $0xf0] sm:$0xff]
    %v275 = vld [vmem:[#allocation8 + $0xf8] sm:$0xff]
    %v276 = vld [vmem:[#allocation8 + $0x100] sm:$0xff]
    %v277 = vld [vmem:[#allocation8 + $0x108] sm:$0xff]
    %v278 = vld [vmem:[#allocation8 + $0x110] sm:$0xff]
    %v279 = vld [vmem:[#allocation8 + $0x118] sm:$0xff]
    %v280 = vld [vmem:[#allocation8 + $0x120] sm:$0xff]
    %v281 = vld [vmem:[#allocation8 + $0x128] sm:$0xff]
    %v282 = vld [vmem:[#allocation8 + $0x130] sm:$0xff]
    %v283 = vld [vmem:[#allocation8 + $0x138] sm:$0xff]
    %v284 = vld [vmem:[#allocation8 + $0x140] sm:$0xff]
    %v285 = vld [vmem:[#allocation8 + $0x148] sm:$0xff]
    %v286 = vld [vmem:[#allocation8 + $0x150] sm:$0xff]
    %v287 = vld [vmem:[#allocation8 + $0x158] sm:$0xff]
    %v288 = vld [vmem:[#allocation8 + $0x160] sm:$0xff]
    %v289 = vld [vmem:[#allocation8 + $0x168] sm:$0xff]
    %v290 = vld [vmem:[#allocation8 + $0x170] sm:$0xff]
    %v291 = vld [vmem:[#allocation8 + $0x178] sm:$0xff]
    %v292 = vld [vmem:[#allocation8 + $0x180] sm:$0xff]
    %v293 = vld [vmem:[#allocation8 + $0x188] sm:$0xff]
    %v294 = vld [vmem:[#allocation8 + $0x190] sm:$0xff]
    %v295 = vld [vmem:[#allocation8 + $0x198] sm:$0xff]
    %v296 = vld [vmem:[#allocation8 + $0x1a0] sm:$0xff]
    %v297 = vld [vmem:[#allocation8 + $0x1a8] sm:$0xff]
    %v298 = vld [vmem:[#allocation8 + $0x1b0] sm:$0xff]
    %v299 = vld [vmem:[#allocation8 + $0x1b8] sm:$0xff]
    %v300 = vld [vmem:[#allocation8 + $0x1c0] sm:$0xff]
    %v301 = vld [vmem:[#allocation8 + $0x1c8] sm:$0xff]
    %v302 = vld [vmem:[#allocation8 + $0x1d0] sm:$0xff]
    %v303 = vld [vmem:[#allocation8 + $0x1d8] sm:$0xff]
    %v304 = vld [vmem:[#allocation8 + $0x1e0] sm:$0xff]
    %v305 = vld [vmem:[#allocation8 + $0x1e8] sm:$0xff]
    %v306 = vld [vmem:[#allocation8 + $0x1f0] sm:$0xff]
    %v307 = vld [vmem:[#allocation8 + $0x1f8] sm:$0xff]
    %v308 = vld [vmem:[#allocation8 + $0x200] sm:$0xff]
    %v309 = vld [vmem:[#allocation8 + $0x208] sm:$0xff]
    %v310 = vld [vmem:[#allocation8 + $0x210] sm:$0xff]
    %v311 = vld [vmem:[#allocation8 + $0x218] sm:$0xff]
    %v312 = vld [vmem:[#allocation8 + $0x220] sm:$0xff]
    %v313 = vld [vmem:[#allocation8 + $0x228] sm:$0xff]
    %v314 = vld [vmem:[#allocation8 + $0x230] sm:$0xff]
    %v315 = vld [vmem:[#allocation8 + $0x238] sm:$0xff]
    %v316 = vld [vmem:[#allocation8 + $0x240] sm:$0xff]
    %v317 = vld [vmem:[#allocation8 + $0x248] sm:$0xff]
    %v318 = vld [vmem:[#allocation8 + $0x250] sm:$0xff]
    %v319 = vld [vmem:[#allocation8 + $0x258] sm:$0xff]
    %v320 = vld [vmem:[#allocation8 + $0x260] sm:$0xff]
    %v321 = vld [vmem:[#allocation8 + $0x268] sm:$0xff]
    %v322 = vld [vmem:[#allocation8 + $0x270] sm:$0xff]
    %v323 = vld [vmem:[#allocation8 + $0x278] sm:$0xff]
    %v324 = vld [vmem:[#allocation8 + $0x280] sm:$0xff]
    %v325 = vld [vmem:[#allocation8 + $0x288] sm:$0xff]
    %v326 = vld [vmem:[#allocation8 + $0x290] sm:$0xff]
    %v327 = vld [vmem:[#allocation8 + $0x298] sm:$0xff]
    %v328 = vld [vmem:[#allocation8 + $0x2a0] sm:$0xff]
    %v329 = vld [vmem:[#allocation8 + $0x2a8] sm:$0xff]
    %v330 = vld [vmem:[#allocation8 + $0x2b0] sm:$0xff]
    %v331 = vld [vmem:[#allocation8 + $0x2b8] sm:$0xff]
    %v332 = vld [vmem:[#allocation8 + $0x2c0] sm:$0xff]
    %v333 = vld [vmem:[#allocation8 + $0x2c8] sm:$0xff]
    %v334 = vld [vmem:[#allocation8 + $0x2d0] sm:$0xff]
    %v335 = vld [vmem:[#allocation8 + $0x2d8] sm:$0xff]
    %v336 = vld [vmem:[#allocation8 + $0x2e0] sm:$0xff]
    %v337 = vld [vmem:[#allocation8 + $0x2e8] sm:$0xff]
    %v338 = vld [vmem:[#allocation8 + $0x2f0] sm:$0xff]
    %v339 = vld [vmem:[#allocation8 + $0x2f8] sm:$0xff]
    %v436 = vunpack.c.l.b16 %v244
    %v437 = vunpack.c.h.b16 %v244
    %v438 = vunpack.c.l.b16 %v245
    %v439 = vunpack.c.h.b16 %v245
    %v440 = vunpack.c.l.b16 %v246
    %v441 = vunpack.c.h.b16 %v246
    %v442 = vunpack.c.l.b16 %v247
    %v443 = vunpack.c.h.b16 %v247
    %v444 = vunpack.c.l.b16 %v248
    %v445 = vunpack.c.h.b16 %v248
    %v446 = vunpack.c.l.b16 %v249
    %v447 = vunpack.c.h.b16 %v249
    %v448 = vunpack.c.l.b16 %v250
    %v449 = vunpack.c.h.b16 %v250
    %v450 = vunpack.c.l.b16 %v251
    %v451 = vunpack.c.h.b16 %v251
    %v452 = vunpack.c.l.b16 %v252
    %v453 = vunpack.c.h.b16 %v252
    %v454 = vunpack.c.l.b16 %v253
    %v455 = vunpack.c.h.b16 %v253
    %v456 = vunpack.c.l.b16 %v254
    %v457 = vunpack.c.h.b16 %v254
    %v458 = vunpack.c.l.b16 %v255
    %v459 = vunpack.c.h.b16 %v255
    %v460 = vunpack.c.l.b16 %v256
    %v461 = vunpack.c.h.b16 %v256
    %v462 = vunpack.c.l.b16 %v257
    %v463 = vunpack.c.h.b16 %v257
    %v464 = vunpack.c.l.b16 %v258
    %v465 = vunpack.c.h.b16 %v258
    %v466 = vunpack.c.l.b16 %v259
    %v467 = vunpack.c.h.b16 %v259
    %v468 = vunpack.c.l.b16 %v260
    %v469 = vunpack.c.h.b16 %v260
    %v470 = vunpack.c.l.b16 %v261
    %v471 = vunpack.c.h.b16 %v261
    %v472 = vunpack.c.l.b16 %v262
    %v473 = vunpack.c.h.b16 %v262
    %v474 = vunpack.c.l.b16 %v263
    %v475 = vunpack.c.h.b16 %v263
    %v476 = vunpack.c.l.b16 %v264
    %v477 = vunpack.c.h.b16 %v264
    %v478 = vunpack.c.l.b16 %v265
    %v479 = vunpack.c.h.b16 %v265
    %v480 = vunpack.c.l.b16 %v266
    %v481 = vunpack.c.h.b16 %v266
    %v482 = vunpack.c.l.b16 %v267
    %v483 = vunpack.c.h.b16 %v267
    %v484 = vunpack.c.l.b16 %v268
    %v485 = vunpack.c.h.b16 %v268
    %v486 = vunpack.c.l.b16 %v269
    %v487 = vunpack.c.h.b16 %v269
    %v488 = vunpack.c.l.b16 %v270
    %v489 = vunpack.c.h.b16 %v270
    %v490 = vunpack.c.l.b16 %v271
    %v491 = vunpack.c.h.b16 %v271
    %v492 = vunpack.c.l.b16 %v272
    %v493 = vunpack.c.h.b16 %v272
    %v494 = vunpack.c.l.b16 %v273
    %v495 = vunpack.c.h.b16 %v273
    %v496 = vunpack.c.l.b16 %v274
    %v497 = vunpack.c.h.b16 %v274
    %v498 = vunpack.c.l.b16 %v275
    %v499 = vunpack.c.h.b16 %v275
    %v500 = vunpack.c.l.b16 %v276
    %v501 = vunpack.c.h.b16 %v276
    %v502 = vunpack.c.l.b16 %v277
    %v503 = vunpack.c.h.b16 %v277
    %v504 = vunpack.c.l.b16 %v278
    %v505 = vunpack.c.h.b16 %v278
    %v506 = vunpack.c.l.b16 %v279
    %v507 = vunpack.c.h.b16 %v279
    %v508 = vunpack.c.l.b16 %v280
    %v509 = vunpack.c.h.b16 %v280
    %v510 = vunpack.c.l.b16 %v281
    %v511 = vunpack.c.h.b16 %v281
    %v512 = vunpack.c.l.b16 %v282
    %v513 = vunpack.c.h.b16 %v282
    %v514 = vunpack.c.l.b16 %v283
    %v515 = vunpack.c.h.b16 %v283
    %v516 = vunpack.c.l.b16 %v284
    %v517 = vunpack.c.h.b16 %v284
    %v518 = vunpack.c.l.b16 %v285
    %v519 = vunpack.c.h.b16 %v285
    %v520 = vunpack.c.l.b16 %v286
    %v521 = vunpack.c.h.b16 %v286
    %v522 = vunpack.c.l.b16 %v287
    %v523 = vunpack.c.h.b16 %v287
    %v524 = vunpack.c.l.b16 %v288
    %v525 = vunpack.c.h.b16 %v288
    %v526 = vunpack.c.l.b16 %v289
    %v527 = vunpack.c.h.b16 %v289
    %v528 = vunpack.c.l.b16 %v290
    %v529 = vunpack.c.h.b16 %v290
    %v530 = vunpack.c.l.b16 %v291
    %v531 = vunpack.c.h.b16 %v291
    %v532 = vunpack.c.l.b16 %v292
    %v533 = vunpack.c.h.b16 %v292
    %v534 = vunpack.c.l.b16 %v293
    %v535 = vunpack.c.h.b16 %v293
    %v536 = vunpack.c.l.b16 %v294
    %v537 = vunpack.c.h.b16 %v294
    %v538 = vunpack.c.l.b16 %v295
    %v539 = vunpack.c.h.b16 %v295
    %v540 = vunpack.c.l.b16 %v296
    %v541 = vunpack.c.h.b16 %v296
    %v542 = vunpack.c.l.b16 %v297
    %v543 = vunpack.c.h.b16 %v297
    %v544 = vunpack.c.l.b16 %v298
    %v545 = vunpack.c.h.b16 %v298
    %v546 = vunpack.c.l.b16 %v299
    %v547 = vunpack.c.h.b16 %v299
    %v548 = vunpack.c.l.b16 %v300
    %v549 = vunpack.c.h.b16 %v300
    %v550 = vunpack.c.l.b16 %v301
    %v551 = vunpack.c.h.b16 %v301
    %v552 = vunpack.c.l.b16 %v302
    %v553 = vunpack.c.h.b16 %v302
    %v554 = vunpack.c.l.b16 %v303
    %v555 = vunpack.c.h.b16 %v303
    %v556 = vunpack.c.l.b16 %v304
    %v557 = vunpack.c.h.b16 %v304
    %v558 = vunpack.c.l.b16 %v305
    %v559 = vunpack.c.h.b16 %v305
    %v560 = vunpack.c.l.b16 %v306
    %v561 = vunpack.c.h.b16 %v306
    %v562 = vunpack.c.l.b16 %v307
    %v563 = vunpack.c.h.b16 %v307
    %v564 = vunpack.c.l.b16 %v308
    %v565 = vunpack.c.h.b16 %v308
    %v566 = vunpack.c.l.b16 %v309
    %v567 = vunpack.c.h.b16 %v309
    %v568 = vunpack.c.l.b16 %v310
    %v569 = vunpack.c.h.b16 %v310
    %v570 = vunpack.c.l.b16 %v311
    %v571 = vunpack.c.h.b16 %v311
    %v572 = vunpack.c.l.b16 %v312
    %v573 = vunpack.c.h.b16 %v312
    %v574 = vunpack.c.l.b16 %v313
    %v575 = vunpack.c.h.b16 %v313
    %v576 = vunpack.c.l.b16 %v314
    %v577 = vunpack.c.h.b16 %v314
    %v578 = vunpack.c.l.b16 %v315
    %v579 = vunpack.c.h.b16 %v315
    %v580 = vunpack.c.l.b16 %v316
    %v581 = vunpack.c.h.b16 %v316
    %v582 = vunpack.c.l.b16 %v317
    %v583 = vunpack.c.h.b16 %v317
    %v584 = vunpack.c.l.b16 %v318
    %v585 = vunpack.c.h.b16 %v318
    %v586 = vunpack.c.l.b16 %v319
    %v587 = vunpack.c.h.b16 %v319
    %v588 = vunpack.c.l.b16 %v320
    %v589 = vunpack.c.h.b16 %v320
    %v590 = vunpack.c.l.b16 %v321
    %v591 = vunpack.c.h.b16 %v321
    %v592 = vunpack.c.l.b16 %v322
    %v593 = vunpack.c.h.b16 %v322
    %v594 = vunpack.c.l.b16 %v323
    %v595 = vunpack.c.h.b16 %v323
    %v596 = vunpack.c.l.b16 %v324
    %v597 = vunpack.c.h.b16 %v324
    %v598 = vunpack.c.l.b16 %v325
    %v599 = vunpack.c.h.b16 %v325
    %v600 = vunpack.c.l.b16 %v326
    %v601 = vunpack.c.h.b16 %v326
    %v602 = vunpack.c.l.b16 %v327
    %v603 = vunpack.c.h.b16 %v327
    %v604 = vunpack.c.l.b16 %v328
    %v605 = vunpack.c.h.b16 %v328
    %v606 = vunpack.c.l.b16 %v329
    %v607 = vunpack.c.h.b16 %v329
    %v608 = vunpack.c.l.b16 %v330
    %v609 = vunpack.c.h.b16 %v330
    %v610 = vunpack.c.l.b16 %v331
    %v611 = vunpack.c.h.b16 %v331
    %v612 = vunpack.c.l.b16 %v332
    %v613 = vunpack.c.h.b16 %v332
    %v614 = vunpack.c.l.b16 %v333
    %v615 = vunpack.c.h.b16 %v333
    %v616 = vunpack.c.l.b16 %v334
    %v617 = vunpack.c.h.b16 %v334
    %v618 = vunpack.c.l.b16 %v335
    %v619 = vunpack.c.h.b16 %v335
    %v620 = vunpack.c.l.b16 %v336
    %v621 = vunpack.c.h.b16 %v336
    %v622 = vunpack.c.l.b16 %v337
    %v623 = vunpack.c.h.b16 %v337
    %v624 = vunpack.c.l.b16 %v338
    %v625 = vunpack.c.h.b16 %v338
    %v626 = vunpack.c.l.b16 %v339
    %v627 = vunpack.c.h.b16 %v339
    %v628 = vpack.c.b16 %v438, %v436
    %v629 = vpack.c.b16 %v439, %v437
    %v630 = vpack.c.b16 %v442, %v440
    %v631 = vpack.c.b16 %v443, %v441
    %v632 = vpack.c.b16 %v446, %v444
    %v633 = vpack.c.b16 %v447, %v445
    %v634 = vpack.c.b16 %v450, %v448
    %v635 = vpack.c.b16 %v451, %v449
    %v636 = vpack.c.b16 %v454, %v452
    %v637 = vpack.c.b16 %v455, %v453
    %v638 = vpack.c.b16 %v458, %v456
    %v639 = vpack.c.b16 %v459, %v457
    %v640 = vpack.c.b16 %v462, %v460
    %v641 = vpack.c.b16 %v463, %v461
    %v642 = vpack.c.b16 %v466, %v464
    %v643 = vpack.c.b16 %v467, %v465
    %v644 = vpack.c.b16 %v470, %v468
    %v645 = vpack.c.b16 %v471, %v469
    %v646 = vpack.c.b16 %v474, %v472
    %v647 = vpack.c.b16 %v475, %v473
    %v648 = vpack.c.b16 %v478, %v476
    %v649 = vpack.c.b16 %v479, %v477
    %v650 = vpack.c.b16 %v482, %v480
    %v651 = vpack.c.b16 %v483, %v481
    %v652 = vpack.c.b16 %v486, %v484
    %v653 = vpack.c.b16 %v487, %v485
    %v654 = vpack.c.b16 %v490, %v488
    %v655 = vpack.c.b16 %v491, %v489
    %v656 = vpack.c.b16 %v494, %v492
    %v657 = vpack.c.b16 %v495, %v493
    %v658 = vpack.c.b16 %v498, %v496
    %v659 = vpack.c.b16 %v499, %v497
    %v660 = vpack.c.b16 %v502, %v500
    %v661 = vpack.c.b16 %v503, %v501
    %v662 = vpack.c.b16 %v506, %v504
    %v663 = vpack.c.b16 %v507, %v505
    %v664 = vpack.c.b16 %v510, %v508
    %v665 = vpack.c.b16 %v511, %v509
    %v666 = vpack.c.b16 %v514, %v512
    %v667 = vpack.c.b16 %v515, %v513
    %v668 = vpack.c.b16 %v518, %v516
    %v669 = vpack.c.b16 %v519, %v517
    %v670 = vpack.c.b16 %v522, %v520
    %v671 = vpack.c.b16 %v523, %v521
    %v672 = vpack.c.b16 %v526, %v524
    %v673 = vpack.c.b16 %v527, %v525
    %v674 = vpack.c.b16 %v530, %v528
    %v675 = vpack.c.b16 %v531, %v529
    %v676 = vpack.c.b16 %v534, %v532
    %v677 = vpack.c.b16 %v535, %v533
    %v678 = vpack.c.b16 %v538, %v536
    %v679 = vpack.c.b16 %v539, %v537
    %v680 = vpack.c.b16 %v542, %v540
    %v681 = vpack.c.b16 %v543, %v541
    %v682 = vpack.c.b16 %v546, %v544
    %v683 = vpack.c.b16 %v547, %v545
    %v684 = vpack.c.b16 %v550, %v548
    %v685 = vpack.c.b16 %v551, %v549
    %v686 = vpack.c.b16 %v554, %v552
    %v687 = vpack.c.b16 %v555, %v553
    %v688 = vpack.c.b16 %v558, %v556
    %v689 = vpack.c.b16 %v559, %v557
    %v690 = vpack.c.b16 %v562, %v560
    %v691 = vpack.c.b16 %v563, %v561
    %v692 = vpack.c.b16 %v566, %v564
    %v693 = vpack.c.b16 %v567, %v565
    %v694 = vpack.c.b16 %v570, %v568
    %v695 = vpack.c.b16 %v571, %v569
    %v696 = vpack.c.b16 %v574, %v572
    %v697 = vpack.c.b16 %v575, %v573
    %v698 = vpack.c.b16 %v578, %v576
    %v699 = vpack.c.b16 %v579, %v577
    %v700 = vpack.c.b16 %v582, %v580
    %v701 = vpack.c.b16 %v583, %v581
    %v702 = vpack.c.b16 %v586, %v584
    %v703 = vpack.c.b16 %v587, %v585
    %v704 = vpack.c.b16 %v590, %v588
    %v705 = vpack.c.b16 %v591, %v589
    %v706 = vpack.c.b16 %v594, %v592
    %v707 = vpack.c.b16 %v595, %v593
    %v708 = vpack.c.b16 %v598, %v596
    %v709 = vpack.c.b16 %v599, %v597
    %v710 = vpack.c.b16 %v602, %v600
    %v711 = vpack.c.b16 %v603, %v601
    %v712 = vpack.c.b16 %v606, %v604
    %v713 = vpack.c.b16 %v607, %v605
    %v714 = vpack.c.b16 %v610, %v608
    %v715 = vpack.c.b16 %v611, %v609
    %v716 = vpack.c.b16 %v614, %v612
    %v717 = vpack.c.b16 %v615, %v613
    %v718 = vpack.c.b16 %v618, %v616
    %v719 = vpack.c.b16 %v619, %v617
    %v720 = vpack.c.b16 %v622, %v620
    %v721 = vpack.c.b16 %v623, %v621
    %v722 = vpack.c.b16 %v626, %v624
    %v723 = vpack.c.b16 %v627, %v625
    %820 = vmatprep.subr.bf16.mxu0 %v629
    %821 = vmatpush1.bf16.msra.mxu0 %v628
    %822 = vmatprep.subr.bf16.mxu0 %v631
    %823 = vmatpush1.bf16.msra.mxu0 %v630
    %824 = vmatprep.subr.bf16.mxu0 %v633
    %825 = vmatpush1.bf16.msra.mxu0 %v632
    %826 = vmatprep.subr.bf16.mxu0 %v635
    %827 = vmatpush1.bf16.msra.mxu0 %v634
    %828 = vmatprep.subr.bf16.mxu0 %v637
    %829 = vmatpush1.bf16.msra.mxu0 %v636
    %830 = vmatprep.subr.bf16.mxu0 %v639
    %831 = vmatpush1.bf16.msra.mxu0 %v638
    %832 = vmatprep.subr.bf16.mxu0 %v641
    %833 = vmatpush1.bf16.msra.mxu0 %v640
    %834 = vmatprep.subr.bf16.mxu0 %v643
    %835 = vmatpush1.bf16.msra.mxu0 %v642
    %836 = vmatprep.subr.bf16.mxu0 %v645
    %837 = vmatpush1.bf16.msra.mxu0 %v644
    %838 = vmatprep.subr.bf16.mxu0 %v647
    %839 = vmatpush1.bf16.msra.mxu0 %v646
    %840 = vmatprep.subr.bf16.mxu0 %v649
    %841 = vmatpush1.bf16.msra.mxu0 %v648
    %842 = vmatprep.subr.bf16.mxu0 %v651
    %843 = vmatpush1.bf16.msra.mxu0 %v650
    %844 = vmatprep.subr.bf16.mxu0 %v653
    %845 = vmatpush1.bf16.msra.mxu0 %v652
    %846 = vmatprep.subr.bf16.mxu0 %v655
    %847 = vmatpush1.bf16.msra.mxu0 %v654
    %848 = vmatprep.subr.bf16.mxu0 %v657
    %849 = vmatpush1.bf16.msra.mxu0 %v656
    %850 = vmatprep.subr.bf16.mxu0 %v659
    %851 = vmatpush1.bf16.msra.mxu0 %v658
    %852 = vmatprep.mubr.bf16.mxu0 %v239
    %853 = vmatmul.mubr.bf16.gmra.mrb[0].mxu0 %v238
    %v854 = vpop.f32.mrb[0].mxu0
    %v855 = vadd.f32 0.0, %v854
    %v856 = vpop.f32.mrb[0].mxu0
    %v857 = vadd.f32 0.0, %v856
    %v858 = vpop.f32.mrb[0].mxu0
    %v859 = vpop.f32.mrb[0].mxu0
    %860 = vdwg.mxu0
    %861 = vmatprep.subr.bf16.mxu0 %v661
    %862 = vmatpush1.bf16.msra.mxu0 %v660
    %863 = vmatprep.subr.bf16.mxu0 %v663
    %864 = vmatpush1.bf16.msra.mxu0 %v662
    %865 = vmatprep.subr.bf16.mxu0 %v665
    %866 = vmatpush1.bf16.msra.mxu0 %v664
    %867 = vmatprep.subr.bf16.mxu0 %v667
    %868 = vmatpush1.bf16.msra.mxu0 %v666
    %869 = vmatprep.subr.bf16.mxu0 %v669
    %870 = vmatpush1.bf16.msra.mxu0 %v668
    %871 = vmatprep.subr.bf16.mxu0 %v671
    %872 = vmatpush1.bf16.msra.mxu0 %v670
    %873 = vmatprep.subr.bf16.mxu0 %v673
    %874 = vmatpush1.bf16.msra.mxu0 %v672
    %875 = vmatprep.subr.bf16.mxu0 %v675
    %876 = vmatpush1.bf16.msra.mxu0 %v674
    %877 = vmatprep.subr.bf16.mxu0 %v677
    %878 = vmatpush1.bf16.msra.mxu0 %v676
    %879 = vmatprep.subr.bf16.mxu0 %v679
    %880 = vmatpush1.bf16.msra.mxu0 %v678
    %881 = vmatprep.subr.bf16.mxu0 %v681
    %882 = vmatpush1.bf16.msra.mxu0 %v680
    %883 = vmatprep.subr.bf16.mxu0 %v683
    %884 = vmatpush1.bf16.msra.mxu0 %v682
    %885 = vmatprep.subr.bf16.mxu0 %v685
    %886 = vmatpush1.bf16.msra.mxu0 %v684
    %887 = vmatprep.subr.bf16.mxu0 %v687
    %888 = vmatpush1.bf16.msra.mxu0 %v686
    %889 = vmatprep.subr.bf16.mxu0 %v689
    %890 = vmatpush1.bf16.msra.mxu0 %v688
    %891 = vmatprep.subr.bf16.mxu0 %v691
    %892 = vmatpush1.bf16.msra.mxu0 %v690
    %893 = vmatprep.mubr.bf16.mxu0 %v241
    %894 = vmatmul.mubr.bf16.gmra.mrb[0].mxu0 %v240
    %v895 = vpop.f32.mrb[0].mxu0
    %v896 = vadd.f32 %v855, %v895
    %v897 = vpop.f32.mrb[0].mxu0
    %v898 = vadd.f32 %v857, %v897
    %v899 = vpop.f32.mrb[0].mxu0
    %v900 = vpop.f32.mrb[0].mxu0
    %901 = vdwg.mxu0
    %902 = vmatprep.subr.bf16.mxu0 %v693
    %903 = vmatpush1.bf16.msra.mxu0 %v692
    %904 = vmatprep.subr.bf16.mxu0 %v695
    %905 = vmatpush1.bf16.msra.mxu0 %v694
    %906 = vmatprep.subr.bf16.mxu0 %v697
    %907 = vmatpush1.bf16.msra.mxu0 %v696
    %908 = vmatprep.subr.bf16.mxu0 %v699
    %909 = vmatpush1.bf16.msra.mxu0 %v698
    %910 = vmatprep.subr.bf16.mxu0 %v701
    %911 = vmatpush1.bf16.msra.mxu0 %v700
    %912 = vmatprep.subr.bf16.mxu0 %v703
    %913 = vmatpush1.bf16.msra.mxu0 %v702
    %914 = vmatprep.subr.bf16.mxu0 %v705
    %915 = vmatpush1.bf16.msra.mxu0 %v704
    %916 = vmatprep.subr.bf16.mxu0 %v707
    %917 = vmatpush1.bf16.msra.mxu0 %v706
    %918 = vmatprep.subr.bf16.mxu0 %v709
    %919 = vmatpush1.bf16.msra.mxu0 %v708
    %920 = vmatprep.subr.bf16.mxu0 %v711
    %921 = vmatpush1.bf16.msra.mxu0 %v710
    %922 = vmatprep.subr.bf16.mxu0 %v713
    %923 = vmatpush1.bf16.msra.mxu0 %v712
    %924 = vmatprep.subr.bf16.mxu0 %v715
    %925 = vmatpush1.bf16.msra.mxu0 %v714
    %926 = vmatprep.subr.bf16.mxu0 %v717
    %927 = vmatpush1.bf16.msra.mxu0 %v716
    %928 = vmatprep.subr.bf16.mxu0 %v719
    %929 = vmatpush1.bf16.msra.mxu0 %v718
    %930 = vmatprep.subr.bf16.mxu0 %v721
    %931 = vmatpush1.bf16.msra.mxu0 %v720
    %932 = vmatprep.subr.bf16.mxu0 %v723
    %933 = vmatpush1.bf16.msra.mxu0 %v722
    %934 = vmatprep.mubr.bf16.mxu0 %v243
    %935 = vmatmul.mubr.bf16.gmra.mrb[0].mxu0 %v242
    %v936 = vpop.f32.mrb[0].mxu0
    %v937 = vadd.f32 %v896, %v936
    %v938 = vpop.f32.mrb[0].mxu0
    %v939 = vadd.f32 %v898, %v938
    %v940 = vpop.f32.mrb[0].mxu0
    %v941 = vpop.f32.mrb[0].mxu0
    %942 = vdwg.mxu0
    %v945 = vcombine.low %v937, %v939
    %v947 = vunpack.c.l.s4 1983009808
    %v948 = vunpack.c.0.s8 %v947
    %v949 = vlaneseq
    %v950 = vshrl.u32 %v949, 7
    %v951 = vsub.s32 %v948, %v950
    %v952 = vrot.slane %v945, %v951
    %v954 = vadd.f32 %v237, %v952
    %955 = vst [vmem:[#allocation2] sm:$0xf] %v954
    // Predicated region
    $region42: #{tpu_custom_call.1} parent=1 // pred_check
      %p956 = pneg %p73
    $region43: #{tpu_custom_call.1} parent=1 // pred_check_branch
      %958 = sbr.rel (%p956) target = $region45
    $region44: #{tpu_custom_call.1} parent=1 // pred_region
      %v959 = vld [vmem:[#allocation2] sm:$0xf]
      %v962 = vunpack.c.l.s4 1983009808
      %v963 = vunpack.c.0.s8 %v962
      %v964 = vlaneseq
      %v965 = vshrl.u32 %v964, 7
      %v966 = vsub.s32 %v963, %v965
      %v967 = vrot.slane %v959, %v966
      %v968 = vcombine.high %v967, %v967
      %v971 = vpack.c.bf16 %v967, %v967
      %v972 = vpack.c.bf16 %v968, %v968
      %v973 = vld [vmem:[#allocation9] sm:$0xf]
      %v974 = vld [vmem:[#allocation9 + $0x4] sm:$0xf]
      %v975 = vld [vmem:[#allocation9 + $0x8] sm:$0xf]
      %v976 = vld [vmem:[#allocation9 + $0xc] sm:$0xf]
      %v977 = vld [vmem:[#allocation9 + $0x10] sm:$0xf]
      %v978 = vld [vmem:[#allocation9 + $0x14] sm:$0xf]
      %v979 = vld [vmem:[#allocation9 + $0x18] sm:$0xf]
      %v980 = vld [vmem:[#allocation9 + $0x1c] sm:$0xf]
      %v981 = vld [vmem:[#allocation9 + $0x20] sm:$0xf]
      %v982 = vld [vmem:[#allocation9 + $0x24] sm:$0xf]
      %v983 = vld [vmem:[#allocation9 + $0x28] sm:$0xf]
      %v984 = vld [vmem:[#allocation9 + $0x2c] sm:$0xf]
      %v985 = vld [vmem:[#allocation9 + $0x30] sm:$0xf]
      %v986 = vld [vmem:[#allocation9 + $0x34] sm:$0xf]
      %v987 = vld [vmem:[#allocation9 + $0x38] sm:$0xf]
      %v988 = vld [vmem:[#allocation9 + $0x3c] sm:$0xf]
      %v989 = vld [vmem:[#allocation9 + $0x40] sm:$0xf]
      %v990 = vld [vmem:[#allocation9 + $0x44] sm:$0xf]
      %v991 = vld [vmem:[#allocation9 + $0x48] sm:$0xf]
      %v992 = vld [vmem:[#allocation9 + $0x4c] sm:$0xf]
      %v993 = vld [vmem:[#allocation9 + $0x50] sm:$0xf]
      %v994 = vld [vmem:[#allocation9 + $0x54] sm:$0xf]
      %v995 = vld [vmem:[#allocation9 + $0x58] sm:$0xf]
      %v996 = vld [vmem:[#allocation9 + $0x5c] sm:$0xf]
      %v997 = vld [vmem:[#allocation9 + $0x60] sm:$0xf]
      %v998 = vld [vmem:[#allocation9 + $0x64] sm:$0xf]
      %v999 = vld [vmem:[#allocation9 + $0x68] sm:$0xf]
      %v1000 = vld [vmem:[#allocation9 + $0x6c] sm:$0xf]
      %v1001 = vld [vmem:[#allocation9 + $0x70] sm:$0xf]
      %v1002 = vld [vmem:[#allocation9 + $0x74] sm:$0xf]
      %v1003 = vld [vmem:[#allocation9 + $0x78] sm:$0xf]
      %v1004 = vld [vmem:[#allocation9 + $0x7c] sm:$0xf]
      %v1005 = vld [vmem:[%s4] sm:$0x1]
      %v1007 = vlaneseq
      %v1008 = vshrl.u32 %v1007, 7
      %v1009 = vsub.s32 0, %v1008
      %v1010 = vrot.slane %v1005, %v1009
      %v1044 = vunpack.c.l.b16 %v973
      %v1045 = vunpack.c.l.b16 %v974
      %v1046 = vunpack.c.l.b16 %v975
      %v1047 = vunpack.c.l.b16 %v976
      %v1048 = vunpack.c.l.b16 %v977
      %v1049 = vunpack.c.l.b16 %v978
      %v1050 = vunpack.c.l.b16 %v979
      %v1051 = vunpack.c.l.b16 %v980
      %v1052 = vunpack.c.l.b16 %v981
      %v1053 = vunpack.c.l.b16 %v982
      %v1054 = vunpack.c.l.b16 %v983
      %v1055 = vunpack.c.l.b16 %v984
      %v1056 = vunpack.c.l.b16 %v985
      %v1057 = vunpack.c.l.b16 %v986
      %v1058 = vunpack.c.l.b16 %v987
      %v1059 = vunpack.c.l.b16 %v988
      %v1060 = vunpack.c.l.b16 %v989
      %v1061 = vunpack.c.l.b16 %v990
      %v1062 = vunpack.c.l.b16 %v991
      %v1063 = vunpack.c.l.b16 %v992
      %v1064 = vunpack.c.l.b16 %v993
      %v1065 = vunpack.c.l.b16 %v994
      %v1066 = vunpack.c.l.b16 %v995
      %v1067 = vunpack.c.l.b16 %v996
      %v1068 = vunpack.c.l.b16 %v997
      %v1069 = vunpack.c.l.b16 %v998
      %v1070 = vunpack.c.l.b16 %v999
      %v1071 = vunpack.c.l.b16 %v1000
      %v1072 = vunpack.c.l.b16 %v1001
      %v1073 = vunpack.c.l.b16 %v1002
      %v1074 = vunpack.c.l.b16 %v1003
      %v1075 = vunpack.c.l.b16 %v1004
      %v1076 = vpack.c.b16 %v1045, %v1044
      %v1077 = vpack.c.b16 %v1047, %v1046
      %v1078 = vpack.c.b16 %v1049, %v1048
      %v1079 = vpack.c.b16 %v1051, %v1050
      %v1080 = vpack.c.b16 %v1053, %v1052
      %v1081 = vpack.c.b16 %v1055, %v1054
      %v1082 = vpack.c.b16 %v1057, %v1056
      %v1083 = vpack.c.b16 %v1059, %v1058
      %v1084 = vpack.c.b16 %v1061, %v1060
      %v1085 = vpack.c.b16 %v1063, %v1062
      %v1086 = vpack.c.b16 %v1065, %v1064
      %v1087 = vpack.c.b16 %v1067, %v1066
      %v1088 = vpack.c.b16 %v1069, %v1068
      %v1089 = vpack.c.b16 %v1071, %v1070
      %v1090 = vpack.c.b16 %v1073, %v1072
      %v1091 = vpack.c.b16 %v1075, %v1074
      %1108 = vmatprep.subr.bf16.mxu0 0
      %1109 = vmatpush1.bf16.msra.mxu0 %v1076
      %1110 = vmatprep.subr.bf16.mxu0 0
      %1111 = vmatpush1.bf16.msra.mxu0 %v1077
      %1112 = vmatprep.subr.bf16.mxu0 0
      %1113 = vmatpush1.bf16.msra.mxu0 %v1078
      %1114 = vmatprep.subr.bf16.mxu0 0
      %1115 = vmatpush1.bf16.msra.mxu0 %v1079
      %1116 = vmatprep.subr.bf16.mxu0 0
      %1117 = vmatpush1.bf16.msra.mxu0 %v1080
      %1118 = vmatprep.subr.bf16.mxu0 0
      %1119 = vmatpush1.bf16.msra.mxu0 %v1081
      %1120 = vmatprep.subr.bf16.mxu0 0
      %1121 = vmatpush1.bf16.msra.mxu0 %v1082
      %1122 = vmatprep.subr.bf16.mxu0 0
      %1123 = vmatpush1.bf16.msra.mxu0 %v1083
      %1124 = vmatprep.subr.bf16.mxu0 0
      %1125 = vmatpush1.bf16.msra.mxu0 %v1084
      %1126 = vmatprep.subr.bf16.mxu0 0
      %1127 = vmatpush1.bf16.msra.mxu0 %v1085
      %1128 = vmatprep.subr.bf16.mxu0 0
      %1129 = vmatpush1.bf16.msra.mxu0 %v1086
      %1130 = vmatprep.subr.bf16.mxu0 0
      %1131 = vmatpush1.bf16.msra.mxu0 %v1087
      %1132 = vmatprep.subr.bf16.mxu0 0
      %1133 = vmatpush1.bf16.msra.mxu0 %v1088
      %1134 = vmatprep.subr.bf16.mxu0 0
      %1135 = vmatpush1.bf16.msra.mxu0 %v1089
      %1136 = vmatprep.subr.bf16.mxu0 0
      %1137 = vmatpush1.bf16.msra.mxu0 %v1090
      %1138 = vmatprep.subr.bf16.mxu0 0
      %1139 = vmatpush1.bf16.msra.mxu0 %v1091
      %1140 = vmatprep.mubr.bf16.mxu0 %v972
      %1141 = vmatmul.mubr.bf16.gmra.mrb[0].mxu0 %v971
      %v1142 = vpop.f32.mrb[0].mxu0
      %v1143 = vadd.f32 %v1010, %v1142
      %v1144 = vpop.f32.mrb[0].mxu0
      %v1145 = vpop.f32.mrb[0].mxu0
      %v1146 = vpop.f32.mrb[0].mxu0
      %1147 = vdwg.mxu0
      %1148 = vst [vmem:[#allocation11] sm:$0x3] %v1143
    $region45: #{tpu_custom_call.1} parent=1 // pred_fallthru
      _
    // Predicated region
    $region46: #{tpu_custom_call.1} parent=1 // pred_check
      _
    $region47: #{tpu_custom_call.1} parent=1 // pred_check_branch
      %1150 = sbr.rel (0) target = $region49
    $region48: #{tpu_custom_call.1} parent=1 // pred_region
      %s1152 = ssub.s32 32, 32
      %1153 = vsyncadd [#allocation5], %s1152
      %s1155 = sshll.u32 [#allocation11], 4
      %s1156 = int_to_ptr.vmem [resolvable:$true] %s1155
      %1158 = dma.vmem_to_hbm [thread:$0]  %s1156, 32, %s5, [#allocation5]
    $region49: #{tpu_custom_call.1} parent=1 // pred_fallthru
      _
    // Predicated region
    $region50: #{tpu_custom_call.1} parent=1 // pred_check
      _
    $region51: #{tpu_custom_call.1} parent=1 // pred_check_branch
      %1160 = sbr.rel (0) target = $region53
    $region52: #{tpu_custom_call.1} parent=1 // pred_region
      %1161 = dma.done [#allocation5], 32
    $region53: #{tpu_custom_call.1} parent=1 // pred_fallthru
      _
    %1162 = vsyncpa [#allocation4], 1
    %1163 = vsyncpa [#allocation7], 1
    %1164 = vsyncpa [#allocation10], 1
    %1165 = vsyncpa [#allocation5], 1

</llo_original>
